<compile_context>
chip_gen: v6e
topology: v6e:2x2x1
jax: 0.10.0
libtpu: 0.0.40
codegen_flags: <defaults>
</compile_context>

<pallas_src>
import jax
import jax.numpy as jnp
from jax import lax
from jax.experimental import pallas as pl
from jax.experimental.pallas import tpu as pltpu


def _mlp_kernel(x_ref,
                w1_ref, b1_ref,
                w2_ref, b2_ref,
                w3_ref, b3_ref,
                w4_ref, b4_ref,
                o_ref):
    """x arrives [TILE_B, in]; every activation is lane-dense [features, TILE_B]."""
    # Stream x as f32 (half the HBM traffic of a host bf16 pre-pass), cast for MXU.
    x = x_ref[...].astype(jnp.bfloat16)                       # [TILE_B, in]

    # layer 1: Linear(in, 8) + ReLU.  Contract feature dim of both operands so
    # the result is [8, TILE_B] without any host/VMEM transpose of x upfront.
    h = lax.dot_general(w1_ref[...], x, (((1,), (1,)), ((), ())),
                        preferred_element_type=jnp.float32) + b1_ref[...]
    h = jnp.maximum(h, 0.0).astype(jnp.bfloat16)              # [8, TILE_B]

    # layer 2: Linear(8, 32) + ReLU
    h = jnp.dot(w2_ref[...], h, preferred_element_type=jnp.float32) + b2_ref[...]
    h = jnp.maximum(h, 0.0).astype(jnp.bfloat16)              # [32, TILE_B]

    # layer 3: Linear(32, 16) + ReLU (kept f32 into the output layer for parity)
    h = jnp.dot(w3_ref[...], h, preferred_element_type=jnp.float32) + b3_ref[...]
    h = jnp.maximum(h, 0.0)                                   # [16, TILE_B] f32

    # output layer: Linear(16, out) + softmax over classes (axis 0 here == dim=1
    # of the original [batch, classes] tensor).
    logits = jnp.dot(w4_ref[...], h, preferred_element_type=jnp.float32) + b4_ref[...]
    m = jnp.max(logits, axis=0, keepdims=True)
    e = jnp.exp(logits - m)
    denom = jnp.sum(e, axis=0, keepdims=True)
    # Exact divide: keeps every softmax column normalized to 1 within f32
    # rounding (the approx reciprocal was not accurate enough and the divide is
    # a negligible fraction of this HBM-bound kernel).
    o_ref[...] = (e / denom).astype(o_ref.dtype)


def _round_up(n, m):
    return (n + m - 1) // m * m


def neural_net_forward(x, params, *, max_tile_b=32768,
                       vmem_limit_bytes=48 * 1024 * 1024,
                       transposed_output=False):
    """x: [batch, input_size] f32.  params: PyTorch layout (w: [out, in], b: [out])."""
    batch, in_size = x.shape
    out_size = params["w4"].shape[0]

    # Tile selection: aim for >=2 grid steps (v7x dual-TC) with a lane-aligned
    # (multiple of 128) tile, capped by the VMEM budget (max_tile_b).  Small
    # batches collapse to one full-array tile (every block dim == array dim).
    tile_b = min(int(max_tile_b), _round_up(pl.cdiv(batch, 2), 128))
    if tile_b >= batch:
        tile_b = batch
    grid = (pl.cdiv(batch, tile_b),)

    # Tiny, VMEM-resident parameters: weights bf16 (MXU inputs), biases f32 [out, 1].
    ws = tuple(params[f"w{i}"].astype(jnp.bfloat16) for i in (1, 2, 3, 4))
    bs = tuple(params[f"b{i}"].astype(jnp.float32).reshape(-1, 1) for i in (1, 2, 3, 4))
    wb = []
    for w, b in zip(ws, bs):
        wb += [w, b]

    def const_spec(shape):
        # Full-array block with a constant block index: DMAed once, stays in VMEM.
        return pl.BlockSpec(shape, lambda i: (0, 0))

    in_specs = [pl.BlockSpec((tile_b, in_size), lambda i: (i, 0))]   # natural x layout
    in_specs += [const_spec(a.shape) for a in wb]
    # Lane-dense output tile: [out_size, tile_b] -> unmasked wide stores.
    out_spec = pl.BlockSpec((out_size, tile_b), lambda i: (0, i))

    out_t = pl.pallas_call(
        _mlp_kernel,
        out_shape=jax.ShapeDtypeStruct((out_size, batch), jnp.float32),
        grid=grid,
        in_specs=in_specs,
        out_specs=out_spec,
        compiler_params=pltpu.CompilerParams(
            dimension_semantics=("parallel",),
            vmem_limit_bytes=vmem_limit_bytes),
    )(x, *wb)

    if transposed_output:
        return out_t                      # [out_size, batch] (no extra pass)
    return out_t.T                        # PyTorch orientation [batch, out_size]


def init_params(key, input_size, output_size):
    """PyTorch nn.Linear init/layout: w [out, in], b [out], U(+/- 1/sqrt(fan_in))."""
    dims = [(input_size, 8), (8, 32), (32, 16), (16, output_size)]
    params = {}
    for i, (fan_in, fan_out) in enumerate(dims, start=1):
        key, kw, kb = jax.random.split(key, 3)
        bound = 1.0 / float(fan_in) ** 0.5
        params[f"w{i}"] = jax.random.uniform(
            kw, (fan_out, fan_in), jnp.float32, -bound, bound)
        params[f"b{i}"] = jax.random.uniform(
            kb, (fan_out,), jnp.float32, -bound, bound)
    return params


def neural_net_reference(x, params):
    """Pure-JAX reference of the PyTorch forward (f32)."""
    h = x
    for i in (1, 2, 3):
        h = jnp.maximum(h @ params[f"w{i}"].T + params[f"b{i}"], 0.0)
    logits = h @ params["w4"].T + params["b4"]
    return jax.nn.softmax(logits, axis=1)


if __name__ == "__main__":
    key = jax.random.PRNGKey(0)
    input_size, output_size = 16, 4
    kx, kp, kx2 = jax.random.split(key, 3)
    params = init_params(kp, input_size, output_size)

    # Small demo shape (single full-array tile path).
    batch = 8
    x = jax.random.normal(kx, (batch, input_size), jnp.float32)
    out = jax.block_until_ready(neural_net_forward(x, params))
    assert out.shape == (batch, output_size)
    assert jnp.allclose(jnp.sum(out, axis=1), 1.0, atol=1e-3)
    ref = neural_net_reference(x, params)
    assert jnp.allclose(out, ref, atol=2e-2), "mismatch vs reference (batch=8)"

    # Multi-tile path: batch=256 -> tile_b=128, grid=(2,), no ragged edge.
    batch2 = 256
    x2 = jax.random.normal(kx2, (batch2, input_size), jnp.float32)
    out2 = jax.block_until_ready(neural_net_forward(x2, params))
    assert out2.shape == (batch2, output_size)
    assert jnp.allclose(jnp.sum(out2, axis=1), 1.0, atol=1e-3)
    ref2 = neural_net_reference(x2, params)
    assert jnp.allclose(out2, ref2, atol=2e-2), "mismatch vs reference (batch=256)"

    print("KERNEL_OK")
</pallas_src>

<mosaic_0001>
module attributes {stable_mosaic.version = 11 : i64} {
  func.func @_mlp_kernel(%arg0: i32, %arg1: memref<8x16xf32, #tpu.memory_space<vmem>>, %arg2: memref<8x16xbf16, #tpu.memory_space<vmem>>, %arg3: memref<8x1xf32, #tpu.memory_space<vmem>>, %arg4: memref<32x8xbf16, #tpu.memory_space<vmem>>, %arg5: memref<32x1xf32, #tpu.memory_space<vmem>>, %arg6: memref<16x32xbf16, #tpu.memory_space<vmem>>, %arg7: memref<16x1xf32, #tpu.memory_space<vmem>>, %arg8: memref<4x16xbf16, #tpu.memory_space<vmem>>, %arg9: memref<4x1xf32, #tpu.memory_space<vmem>>, %arg10: memref<4x8xf32, #tpu.memory_space<vmem>>) attributes {dimension_semantics = [#tpu.dimension_semantics<parallel>], iteration_bounds = array<i64: 1>, scalar_prefetch = 0 : i64, scratch_operands = 0 : i64, tpu.core_type = #tpu.core_type<tc>, window_params = [{transform_indices = @transform_0, window_bounds = array<i64: 8, 16>}, {pipeline_mode = #tpu.pipeline_mode<synchronous>, transform_indices = @transform_1, window_bounds = array<i64: 8, 16>}, {pipeline_mode = #tpu.pipeline_mode<synchronous>, transform_indices = @transform_2, window_bounds = array<i64: 8, 1>}, {pipeline_mode = #tpu.pipeline_mode<synchronous>, transform_indices = @transform_3, window_bounds = array<i64: 32, 8>}, {pipeline_mode = #tpu.pipeline_mode<synchronous>, transform_indices = @transform_4, window_bounds = array<i64: 32, 1>}, {pipeline_mode = #tpu.pipeline_mode<synchronous>, transform_indices = @transform_5, window_bounds = array<i64: 16, 32>}, {pipeline_mode = #tpu.pipeline_mode<synchronous>, transform_indices = @transform_6, window_bounds = array<i64: 16, 1>}, {pipeline_mode = #tpu.pipeline_mode<synchronous>, transform_indices = @transform_7, window_bounds = array<i64: 4, 16>}, {pipeline_mode = #tpu.pipeline_mode<synchronous>, transform_indices = @transform_8, window_bounds = array<i64: 4, 1>}, {transform_indices = @transform_9, window_bounds = array<i64: 4, 8>}]} {
    %c0 = arith.constant 0 : index
    %c0_0 = arith.constant 0 : index
    %0 = vector.load %arg1[%c0, %c0_0] : memref<8x16xf32, #tpu.memory_space<vmem>>, vector<8x16xf32>
    %1 = arith.truncf %0 : vector<8x16xf32> to vector<8x16xbf16>
    %c0_1 = arith.constant 0 : index
    %c0_2 = arith.constant 0 : index
    %2 = vector.load %arg2[%c0_1, %c0_2] : memref<8x16xbf16, #tpu.memory_space<vmem>>, vector<8x16xbf16>
    %cst = arith.constant dense<0.000000e+00> : vector<8x8xf32>
    %3 = tpu.matmul %2, %1, %cst {dimension_numbers = #tpu.dot_dimension_numbers<[1], [1], [0], [0], [0, 0, 1, 0], [], []>} : vector<8x16xbf16>, vector<8x16xbf16>, vector<8x8xf32> -> vector<8x8xf32>
    %c0_3 = arith.constant 0 : index
    %c0_4 = arith.constant 0 : index
    %4 = vector.load %arg3[%c0_3, %c0_4] : memref<8x1xf32, #tpu.memory_space<vmem>>, vector<8x1xf32>
    %5 = vector.broadcast %4 : vector<8x1xf32> to vector<8x8xf32>
    %6 = arith.addf %3, %5 : vector<8x8xf32>
    %cst_5 = arith.constant 0.000000e+00 : f32
    %7 = vector.broadcast %cst_5 : f32 to vector<8x8xf32>
    %8 = arith.maximumf %6, %7 : vector<8x8xf32>
    %9 = arith.truncf %8 : vector<8x8xf32> to vector<8x8xbf16>
    %c0_6 = arith.constant 0 : index
    %c0_7 = arith.constant 0 : index
    %10 = vector.load %arg4[%c0_6, %c0_7] : memref<32x8xbf16, #tpu.memory_space<vmem>>, vector<32x8xbf16>
    %cst_8 = arith.constant dense<0.000000e+00> : vector<32x8xf32>
    %11 = tpu.matmul %10, %9, %cst_8 {dimension_numbers = #tpu.dot_dimension_numbers<[1], [0], [0], [1], [0, 0, 1, 1], [], []>} : vector<32x8xbf16>, vector<8x8xbf16>, vector<32x8xf32> -> vector<32x8xf32>
    %c0_9 = arith.constant 0 : index
    %c0_10 = arith.constant 0 : index
    %12 = vector.load %arg5[%c0_9, %c0_10] : memref<32x1xf32, #tpu.memory_space<vmem>>, vector<32x1xf32>
    %13 = vector.broadcast %12 : vector<32x1xf32> to vector<32x8xf32>
    %14 = arith.addf %11, %13 : vector<32x8xf32>
    %cst_11 = arith.constant 0.000000e+00 : f32
    %15 = vector.broadcast %cst_11 : f32 to vector<32x8xf32>
    %16 = arith.maximumf %14, %15 : vector<32x8xf32>
    %17 = arith.truncf %16 : vector<32x8xf32> to vector<32x8xbf16>
    %c0_12 = arith.constant 0 : index
    %c0_13 = arith.constant 0 : index
    %18 = vector.load %arg6[%c0_12, %c0_13] : memref<16x32xbf16, #tpu.memory_space<vmem>>, vector<16x32xbf16>
    %cst_14 = arith.constant dense<0.000000e+00> : vector<16x8xf32>
    %19 = tpu.matmul %18, %17, %cst_14 {dimension_numbers = #tpu.dot_dimension_numbers<[1], [0], [0], [1], [0, 0, 1, 1], [], []>} : vector<16x32xbf16>, vector<32x8xbf16>, vector<16x8xf32> -> vector<16x8xf32>
    %c0_15 = arith.constant 0 : index
    %c0_16 = arith.constant 0 : index
    %20 = vector.load %arg7[%c0_15, %c0_16] : memref<16x1xf32, #tpu.memory_space<vmem>>, vector<16x1xf32>
    %21 = vector.broadcast %20 : vector<16x1xf32> to vector<16x8xf32>
    %22 = arith.addf %19, %21 : vector<16x8xf32>
    %cst_17 = arith.constant 0.000000e+00 : f32
    %23 = vector.broadcast %cst_17 : f32 to vector<16x8xf32>
    %24 = arith.maximumf %22, %23 : vector<16x8xf32>
    %c0_18 = arith.constant 0 : index
    %c0_19 = arith.constant 0 : index
    %25 = vector.load %arg8[%c0_18, %c0_19] : memref<4x16xbf16, #tpu.memory_space<vmem>>, vector<4x16xbf16>
    %cst_20 = arith.constant dense<0.000000e+00> : vector<4x8xf32>
    %26 = tpu.matmul %25, %24, %cst_20 {dimension_numbers = #tpu.dot_dimension_numbers<[1], [0], [0], [1], [0, 0, 1, 1], [], []>} : vector<4x16xbf16>, vector<16x8xf32>, vector<4x8xf32> -> vector<4x8xf32>
    %c0_21 = arith.constant 0 : index
    %c0_22 = arith.constant 0 : index
    %27 = vector.load %arg9[%c0_21, %c0_22] : memref<4x1xf32, #tpu.memory_space<vmem>>, vector<4x1xf32>
    %28 = vector.broadcast %27 : vector<4x1xf32> to vector<4x8xf32>
    %29 = arith.addf %26, %28 : vector<4x8xf32>
    %cst_23 = arith.constant dense<0xFF800000> : vector<8xf32>
    %30 = vector.multi_reduction <maximumf>, %29, %cst_23 [0] : vector<4x8xf32> to vector<8xf32>
    %31 = vector.shape_cast %30 : vector<8xf32> to vector<1x8xf32>
    %32 = vector.broadcast %31 : vector<1x8xf32> to vector<4x8xf32>
    %33 = arith.subf %29, %32 : vector<4x8xf32>
    %34 = math.exp %33 : vector<4x8xf32>
    %cst_24 = arith.constant dense<0.000000e+00> : vector<8xf32>
    %35 = vector.multi_reduction <add>, %34, %cst_24 [0] : vector<4x8xf32> to vector<8xf32>
    %36 = vector.shape_cast %35 : vector<8xf32> to vector<1x8xf32>
    %37 = vector.broadcast %36 : vector<1x8xf32> to vector<4x8xf32>
    %38 = arith.divf %34, %37 : vector<4x8xf32>
    %c0_25 = arith.constant 0 : index
    %c0_26 = arith.constant 0 : index
    %39 = vector.load %arg10[%c0_25, %c0_26] : memref<4x8xf32, #tpu.memory_space<vmem>>, vector<4x8xf32>
    tpu.vector_store %arg10[%c0_25, %c0_26], %38 {strides = array<i32>} : memref<4x8xf32, #tpu.memory_space<vmem>>, vector<4x8xf32>,
    return
  }
  func.func @transform_0(%arg0: i32) -> (i32, i32) {
    %c0_i32 = arith.constant 0 : i32
    %c0_i32_0 = arith.constant 0 : i32
    return %arg0, %c0_i32 : i32, i32
  }
  func.func @transform_1(%arg0: i32) -> (i32, i32) {
    %c0_i32 = arith.constant 0 : i32
    %c0_i32_0 = arith.constant 0 : i32
    %c0_i32_1 = arith.constant 0 : i32
    return %c0_i32, %c0_i32_0 : i32, i32
  }
  func.func @transform_2(%arg0: i32) -> (i32, i32) {
    %c0_i32 = arith.constant 0 : i32
    %c0_i32_0 = arith.constant 0 : i32
    %c0_i32_1 = arith.constant 0 : i32
    return %c0_i32, %c0_i32_0 : i32, i32
  }
  func.func @transform_3(%arg0: i32) -> (i32, i32) {
    %c0_i32 = arith.constant 0 : i32
    %c0_i32_0 = arith.constant 0 : i32
    %c0_i32_1 = arith.constant 0 : i32
    return %c0_i32, %c0_i32_0 : i32, i32
  }
  func.func @transform_4(%arg0: i32) -> (i32, i32) {
    %c0_i32 = arith.constant 0 : i32
    %c0_i32_0 = arith.constant 0 : i32
    %c0_i32_1 = arith.constant 0 : i32
    return %c0_i32, %c0_i32_0 : i32, i32
  }
  func.func @transform_5(%arg0: i32) -> (i32, i32) {
    %c0_i32 = arith.constant 0 : i32
    %c0_i32_0 = arith.constant 0 : i32
    %c0_i32_1 = arith.constant 0 : i32
    return %c0_i32, %c0_i32_0 : i32, i32
  }
  func.func @transform_6(%arg0: i32) -> (i32, i32) {
    %c0_i32 = arith.constant 0 : i32
    %c0_i32_0 = arith.constant 0 : i32
    %c0_i32_1 = arith.constant 0 : i32
    return %c0_i32, %c0_i32_0 : i32, i32
  }
  func.func @transform_7(%arg0: i32) -> (i32, i32) {
    %c0_i32 = arith.constant 0 : i32
    %c0_i32_0 = arith.constant 0 : i32
    %c0_i32_1 = arith.constant 0 : i32
    return %c0_i32, %c0_i32_0 : i32, i32
  }
  func.func @transform_8(%arg0: i32) -> (i32, i32) {
    %c0_i32 = arith.constant 0 : i32
    %c0_i32_0 = arith.constant 0 : i32
    %c0_i32_1 = arith.constant 0 : i32
    return %c0_i32, %c0_i32_0 : i32, i32
  }
  func.func @transform_9(%arg0: i32) -> (i32, i32) {
    %c0_i32 = arith.constant 0 : i32
    %c0_i32_0 = arith.constant 0 : i32
    return %c0_i32, %arg0 : i32, i32
  }
}

</mosaic_0001>

<llo_original>
// kernel: tpu_custom_call.1
$region0: #{tpu_custom_call.1}
  #allocation0 [shape = 'u32[]', space=smem, size = 0x4, offset = 0x4, fixed_abs, tag = 'smem constant byte address 0x4 - core index']
  #allocation1 [shape = 'u32[144,128]{1,0:T(1,128)}', space=vmem, size = 0x12000, scoped, tag = 'internal scratch']
  %s0 = inlined_call_operand.vmem [shape: f32[8,16], index: 0, kind: input, shape index: {}]
  %s1 = inlined_call_operand.vmem [shape: bf16[8,16], index: 1, kind: input, shape index: {}]
  %s2 = inlined_call_operand.vmem [shape: f32[8,1], index: 2, kind: input, shape index: {}]
  %s3 = inlined_call_operand.vmem [shape: bf16[32,8], index: 3, kind: input, shape index: {}]
  %s4 = inlined_call_operand.vmem [shape: f32[32,1], index: 4, kind: input, shape index: {}]
  %s5 = inlined_call_operand.vmem [shape: bf16[16,32], index: 5, kind: input, shape index: {}]
  %s6 = inlined_call_operand.vmem [shape: f32[16,1], index: 6, kind: input, shape index: {}]
  %s7 = inlined_call_operand.vmem [shape: bf16[4,16], index: 7, kind: input, shape index: {}]
  %s8 = inlined_call_operand.vmem [shape: f32[4,1], index: 8, kind: input, shape index: {}]
  %s9 = inlined_call_operand.hbm [shape: f32[4,8], index: 9, kind: output, shape index: {}]
  %s10 = sld [smem:[#allocation0]]
  $region46: #{tpu_custom_call.1} parent=0
    _
  %s12 = ssub.s32 1, %s10
  %s13 = scalar_select 0, %s12, %s10
  $region1: #{tpu_custom_call.1} parent=0
    #allocation2 [shape = 'u8[2048]{0}', space=vmem, size = 0x800, scoped, tag = 'output window, operand 0, single buffered']
    #allocation3 [shape = 's32[1]{0}', space=sflag, size = 0x4, scoped, tag = 'scoped memory for tpu_custom_call.1']
    %14 = vsyncpa [#allocation3], 0
    // Predicated region
    $region2: #{tpu_custom_call.1} parent=1 // pred_check
      _
    $region3: #{tpu_custom_call.1} parent=1 // pred_check_branch
      %16 = sbr.rel (0) target = $region5
    $region4: #{tpu_custom_call.1} parent=1 // pred_region
      _
    $region5: #{tpu_custom_call.1} parent=1 // pred_fallthru
      _
    // Predicated region
    $region6: #{tpu_custom_call.1} parent=1 // pred_check
      _
    $region7: #{tpu_custom_call.1} parent=1 // pred_check_branch
      %18 = sbr.rel (0) target = $region9
    $region8: #{tpu_custom_call.1} parent=1 // pred_region
      _
    $region9: #{tpu_custom_call.1} parent=1 // pred_fallthru
      _
    // Predicated region
    $region10: #{tpu_custom_call.1} parent=1 // pred_check
      _
    $region11: #{tpu_custom_call.1} parent=1 // pred_check_branch
      %20 = sbr.rel (0) target = $region13
    $region12: #{tpu_custom_call.1} parent=1 // pred_region
      _
    $region13: #{tpu_custom_call.1} parent=1 // pred_fallthru
      _
    // Predicated region
    $region14: #{tpu_custom_call.1} parent=1 // pred_check
      _
    $region15: #{tpu_custom_call.1} parent=1 // pred_check_branch
      %22 = sbr.rel (0) target = $region17
    $region16: #{tpu_custom_call.1} parent=1 // pred_region
      _
    $region17: #{tpu_custom_call.1} parent=1 // pred_fallthru
      _
    // Predicated region
    $region18: #{tpu_custom_call.1} parent=1 // pred_check
      _
    $region19: #{tpu_custom_call.1} parent=1 // pred_check_branch
      %24 = sbr.rel (0) target = $region21
    $region20: #{tpu_custom_call.1} parent=1 // pred_region
      _
    $region21: #{tpu_custom_call.1} parent=1 // pred_fallthru
      _
    // Predicated region
    $region22: #{tpu_custom_call.1} parent=1 // pred_check
      _
    $region23: #{tpu_custom_call.1} parent=1 // pred_check_branch
      %26 = sbr.rel (0) target = $region25
    $region24: #{tpu_custom_call.1} parent=1 // pred_region
      _
    $region25: #{tpu_custom_call.1} parent=1 // pred_fallthru
      _
    // Predicated region
    $region26: #{tpu_custom_call.1} parent=1 // pred_check
      _
    $region27: #{tpu_custom_call.1} parent=1 // pred_check_branch
      %28 = sbr.rel (0) target = $region29
    $region28: #{tpu_custom_call.1} parent=1 // pred_region
      _
    $region29: #{tpu_custom_call.1} parent=1 // pred_fallthru
      _
    // Predicated region
    $region30: #{tpu_custom_call.1} parent=1 // pred_check
      _
    $region31: #{tpu_custom_call.1} parent=1 // pred_check_branch
      %30 = sbr.rel (0) target = $region33
    $region32: #{tpu_custom_call.1} parent=1 // pred_region
      _
    $region33: #{tpu_custom_call.1} parent=1 // pred_fallthru
      _
    // Predicated region
    $region34: #{tpu_custom_call.1} parent=1 // pred_check
      _
    $region35: #{tpu_custom_call.1} parent=1 // pred_check_branch
      %32 = sbr.rel (0) target = $region37
    $region36: #{tpu_custom_call.1} parent=1 // pred_region
      _
    $region37: #{tpu_custom_call.1} parent=1 // pred_fallthru
      _
    %v34 = vld [vmem:[%s0] sm:$0xff]
    %v35 = vpack.c.bf16 %v34, %v34
    %v36 = vld [vmem:[%s1] sm:$0xf]
    %v37 = vld [vmem:[%s2] sm:$0xff]
    %39 = vset.pattern.permute.xlu0 0
    %40 = vperm.xlu0 %39, %v37
    %v41 = vpop.permute.xlu0 %40
    %vm43 = vcmask 130048
    %v45 = vsel %vm43, %v36, 0
    %v48 = vsel %vm43, %v35, 0
    %50 = vmatprep.subr.bf16.mxu0 0
    %51 = vmatpush1.bf16.xpose.msra.mxu0 0
    %52 = vmatprep.subr.bf16.mxu0 0
    %53 = vmatpush1.bf16.xpose.msra.mxu0 0
    %54 = vmatprep.subr.bf16.mxu0 0
    %55 = vmatpush1.bf16.xpose.msra.mxu0 0
    %56 = vmatprep.subr.bf16.mxu0 0
    %57 = vmatpush1.bf16.xpose.msra.mxu0 0
    %58 = vmatprep.subr.bf16.mxu0 0
    %59 = vmatpush1.bf16.xpose.msra.mxu0 0
    %60 = vmatprep.subr.bf16.mxu0 0
    %61 = vmatpush1.bf16.xpose.msra.mxu0 0
    %62 = vmatprep.subr.bf16.mxu0 0
    %63 = vmatpush1.bf16.xpose.msra.mxu0 0
    %64 = vmatprep.subr.bf16.mxu0 0
    %65 = vmatpush1.bf16.xpose.msra.mxu0 %v48
    %66 = vmatprep.subr.bf16.mxu0 0
    %67 = vmatpush2.bf16.xpose.msra.mxu0 0
    %68 = vmatprep.subr.bf16.mxu0 0
    %69 = vmatpush2.bf16.xpose.msra.mxu0 0
    %70 = vmatprep.subr.bf16.mxu0 0
    %71 = vmatpush2.bf16.xpose.msra.mxu0 0
    %72 = vmatprep.subr.bf16.mxu0 0
    %73 = vmatpush2.bf16.xpose.msra.mxu0 0
    %74 = vmatprep.subr.bf16.mxu0 0
    %75 = vmatpush2.bf16.xpose.msra.mxu0 0
    %76 = vmatprep.subr.bf16.mxu0 0
    %77 = vmatpush2.bf16.xpose.msra.mxu0 0
    %78 = vmatprep.subr.bf16.mxu0 0
    %79 = vmatpush2.bf16.xpose.msra.mxu0 0
    %80 = vmatprep.subr.bf16.mxu0 0
    %81 = vmatpush2.bf16.xpose.msra.mxu0 0
    %82 = vmatprep.mubr.bf16.mxu0 0
    %83 = vmatmul.mubr.bf16.gmra.mxu0 %v45
    %v84 = vpop.f32.mrf.mxu0
    %v85 = vadd.f32 %v41, %v84
    %v86 = vpop.f32.mrf.mxu0
    %v87 = vpop.f32.mrf.mxu0
    %v88 = vpop.f32.mrf.mxu0
    %89 = vdwg.mxu0
    %v90 = vmax.f32 %v85, 0.0
    %v91 = vpack.c.bf16 %v90, %v90
    %v92 = vld [vmem:[%s3] sm:$0xf]
    %v93 = vld [vmem:[%s3 + $0x4] sm:$0xf]
    %v94 = vld [vmem:[%s3 + $0x8] sm:$0xf]
    %v95 = vld [vmem:[%s3 + $0xc] sm:$0xf]
    %v96 = vld [vmem:[%s4] sm:$0xff]
    %v97 = vld [vmem:[%s4 + $0x8] sm:$0xff]
    %v98 = vld [vmem:[%s4 + $0x10] sm:$0xff]
    %v99 = vld [vmem:[%s4 + $0x18] sm:$0xff]
    %101 = vset.pattern.permute.xlu0 0
    %102 = vperm.xlu0 %101, %v96
    %v103 = vpop.permute.xlu0 %102
    %106 = vset.pattern.permute.xlu0 0
    %107 = vperm.xlu0 %106, %v97
    %v108 = vpop.permute.xlu0 %107
    %111 = vset.pattern.permute.xlu0 0
    %112 = vperm.xlu0 %111, %v98
    %v113 = vpop.permute.xlu0 %112
    %116 = vset.pattern.permute.xlu0 0
    %117 = vperm.xlu0 %116, %v99
    %v118 = vpop.permute.xlu0 %117
    %v124 = vunpack.c.l.b16 %v92
    %v125 = vunpack.c.l.b16 %v93
    %v126 = vunpack.c.l.b16 %v94
    %v127 = vunpack.c.l.b16 %v95
    %v128 = vpack.c.b16 %v125, %v124
    %v129 = vpack.c.b16 %v127, %v126
    %vm130 = vcmask 64512
    %v132 = vsel %vm130, %v128, 0
    %v135 = vsel %vm130, %v129, 0
    %vm137 = vcmask 1043456
    %v139 = vsel %vm137, %v91, 0
    %141 = vmatprep.subr.bf16.mxu0 0
    %142 = vmatpush1.bf16.msra.mxu0 0
    %143 = vmatprep.subr.bf16.mxu0 0
    %144 = vmatpush1.bf16.msra.mxu0 0
    %145 = vmatprep.subr.bf16.mxu0 0
    %146 = vmatpush1.bf16.msra.mxu0 0
    %147 = vmatprep.subr.bf16.mxu0 0
    %148 = vmatpush1.bf16.msra.mxu0 0
    %149 = vmatprep.subr.bf16.mxu0 0
    %150 = vmatpush1.bf16.msra.mxu0 0
    %151 = vmatprep.subr.bf16.mxu0 0
    %152 = vmatpush1.bf16.msra.mxu0 0
    %153 = vmatprep.subr.bf16.mxu0 0
    %154 = vmatpush1.bf16.msra.mxu0 0
    %155 = vmatprep.subr.bf16.mxu0 0
    %156 = vmatpush1.bf16.msra.mxu0 %v139
    %157 = vmatprep.subr.bf16.mxu0 0
    %158 = vmatpush2.bf16.msra.mxu0 0
    %159 = vmatprep.subr.bf16.mxu0 0
    %160 = vmatpush2.bf16.msra.mxu0 0
    %161 = vmatprep.subr.bf16.mxu0 0
    %162 = vmatpush2.bf16.msra.mxu0 0
    %163 = vmatprep.subr.bf16.mxu0 0
    %164 = vmatpush2.bf16.msra.mxu0 0
    %165 = vmatprep.subr.bf16.mxu0 0
    %166 = vmatpush2.bf16.msra.mxu0 0
    %167 = vmatprep.subr.bf16.mxu0 0
    %168 = vmatpush2.bf16.msra.mxu0 0
    %169 = vmatprep.subr.bf16.mxu0 0
    %170 = vmatpush2.bf16.msra.mxu0 0
    %171 = vmatprep.subr.bf16.mxu0 0
    %172 = vmatpush2.bf16.msra.mxu0 0
    %173 = vmatprep.mubr.bf16.mxu0 0
    %174 = vmatmul.mubr.bf16.gmra.mxu0 %v132
    %v175 = vpop.f32.mrf.mxu0
    %v176 = vadd.f32 %v103, %v175
    %v177 = vpop.f32.mrf.mxu0
    %v178 = vpop.f32.mrf.mxu0
    %v179 = vadd.f32 %v108, %v178
    %v180 = vpop.f32.mrf.mxu0
    %181 = vmatprep.mubr.bf16.mxu0 0
    %182 = vmatmul.mubr.bf16.gmra.mxu0 %v135
    %v183 = vpop.f32.mrf.mxu0
    %v184 = vadd.f32 %v113, %v183
    %v185 = vpop.f32.mrf.mxu0
    %v186 = vpop.f32.mrf.mxu0
    %v187 = vadd.f32 %v118, %v186
    %v188 = vpop.f32.mrf.mxu0
    %189 = vdwg.mxu0
    %v190 = vmax.f32 %v176, 0.0
    %v191 = vmax.f32 %v179, 0.0
    %v192 = vmax.f32 %v184, 0.0
    %v193 = vmax.f32 %v187, 0.0
    %v194 = vpack.c.bf16 %v191, %v190
    %v195 = vpack.c.bf16 %v193, %v192
    %v196 = vld [vmem:[%s5] sm:$0xf]
    %v197 = vld [vmem:[%s5 + $0x4] sm:$0xf]
    %v198 = vld [vmem:[%s6] sm:$0xff]
    %v199 = vld [vmem:[%s6 + $0x8] sm:$0xff]
    %201 = vset.pattern.permute.xlu0 0
    %202 = vperm.xlu0 %201, %v198
    %v203 = vpop.permute.xlu0 %202
    %206 = vset.pattern.permute.xlu0 0
    %207 = vperm.xlu0 %206, %v199
    %v208 = vpop.permute.xlu0 %207
    %v212 = vunpack.c.l.b16 %v196
    %v213 = vunpack.c.l.b16 %v197
    %v214 = vpack.c.b16 %v213, %v212
    %vm215 = vcmask 261120
    %v217 = vsel %vm215, %v214, 0
    %219 = vmatprep.subr.bf16.mxu0 0
    %220 = vmatpush1.bf16.msra.mxu0 0
    %221 = vmatprep.subr.bf16.mxu0 0
    %222 = vmatpush1.bf16.msra.mxu0 0
    %223 = vmatprep.subr.bf16.mxu0 0
    %224 = vmatpush1.bf16.msra.mxu0 0
    %225 = vmatprep.subr.bf16.mxu0 0
    %226 = vmatpush1.bf16.msra.mxu0 0
    %227 = vmatprep.subr.bf16.mxu0 0
    %228 = vmatpush1.bf16.msra.mxu0 0
    %229 = vmatprep.subr.bf16.mxu0 0
    %230 = vmatpush1.bf16.msra.mxu0 0
    %231 = vmatprep.subr.bf16.mxu0 0
    %232 = vmatpush1.bf16.msra.mxu0 %v195
    %233 = vmatprep.subr.bf16.mxu0 0
    %234 = vmatpush1.bf16.msra.mxu0 %v194
    %235 = vmatprep.subr.bf16.mxu0 0
    %236 = vmatpush2.bf16.msra.mxu0 0
    %237 = vmatprep.subr.bf16.mxu0 0
    %238 = vmatpush2.bf16.msra.mxu0 0
    %239 = vmatprep.subr.bf16.mxu0 0
    %240 = vmatpush2.bf16.msra.mxu0 0
    %241 = vmatprep.subr.bf16.mxu0 0
    %242 = vmatpush2.bf16.msra.mxu0 0
    %243 = vmatprep.subr.bf16.mxu0 0
    %244 = vmatpush2.bf16.msra.mxu0 0
    %245 = vmatprep.subr.bf16.mxu0 0
    %246 = vmatpush2.bf16.msra.mxu0 0
    %247 = vmatprep.subr.bf16.mxu0 0
    %248 = vmatpush2.bf16.msra.mxu0 0
    %249 = vmatprep.subr.bf16.mxu0 0
    %250 = vmatpush2.bf16.msra.mxu0 0
    %251 = vmatprep.mubr.bf16.mxu0 0
    %252 = vmatmul.mubr.bf16.gmra.mxu0 %v217
    %v253 = vpop.f32.mrf.mxu0
    %v254 = vadd.f32 %v203, %v253
    %v255 = vpop.f32.mrf.mxu0
    %v256 = vpop.f32.mrf.mxu0
    %v257 = vadd.f32 %v208, %v256
    %v258 = vpop.f32.mrf.mxu0
    %259 = vdwg.mxu0
    %v260 = vmax.f32 %v254, 0.0
    %v261 = vmax.f32 %v257, 0.0
    %v262 = vld [vmem:[%s7] sm:$0x3]
    %v263 = vld [vmem:[%s8] sm:$0xf]
    %265 = vset.pattern.permute.xlu0 0
    %266 = vperm.xlu0 %265, %v263
    %v267 = vpop.permute.xlu0 %266
    %v270 = vsel %vm43, %v262, 0
    %272 = vmatprep.subr.mxu0 0.0
    %273 = vmatpush1.msra.mxu0 0.0
    %274 = vmatprep.subr.mxu0 0.0
    %275 = vmatpush1.msra.mxu0 0.0
    %276 = vmatprep.subr.mxu0 0.0
    %277 = vmatpush1.msra.mxu0 0.0
    %278 = vmatprep.subr.mxu0 0.0
    %279 = vmatpush1.msra.mxu0 0.0
    %280 = vmatprep.subr.mxu0 0.0
    %281 = vmatpush1.msra.mxu0 0.0
    %282 = vmatprep.subr.mxu0 0.0
    %283 = vmatpush1.msra.mxu0 0.0
    %284 = vmatprep.subr.mxu0 0.0
    %285 = vmatpush1.msra.mxu0 0.0
    %286 = vmatprep.subr.mxu0 0.0
    %287 = vmatpush1.msra.mxu0 0.0
    %288 = vmatprep.subr.mxu0 0.0
    %289 = vmatpush1.msra.mxu0 0.0
    %290 = vmatprep.subr.mxu0 0.0
    %291 = vmatpush1.msra.mxu0 0.0
    %292 = vmatprep.subr.mxu0 0.0
    %293 = vmatpush1.msra.mxu0 0.0
    %294 = vmatprep.subr.mxu0 0.0
    %295 = vmatpush1.msra.mxu0 0.0
    %296 = vmatprep.subr.mxu0 0.0
    %297 = vmatpush1.msra.mxu0 0.0
    %298 = vmatprep.subr.mxu0 0.0
    %299 = vmatpush1.msra.mxu0 0.0
    %300 = vmatprep.subr.mxu0 0.0
    %301 = vmatpush1.msra.mxu0 %v261
    %302 = vmatprep.subr.mxu0 0.0
    %303 = vmatpush1.msra.mxu0 %v260
    %304 = vmatprep.subr.mxu0 0.0
    %305 = vmatpush2.msra.mxu0 0.0
    %306 = vmatprep.subr.mxu0 0.0
    %307 = vmatpush2.msra.mxu0 0.0
    %308 = vmatprep.subr.mxu0 0.0
    %309 = vmatpush2.msra.mxu0 0.0
    %310 = vmatprep.subr.mxu0 0.0
    %311 = vmatpush2.msra.mxu0 0.0
    %312 = vmatprep.subr.mxu0 0.0
    %313 = vmatpush2.msra.mxu0 0.0
    %314 = vmatprep.subr.mxu0 0.0
    %315 = vmatpush2.msra.mxu0 0.0
    %316 = vmatprep.subr.mxu0 0.0
    %317 = vmatpush2.msra.mxu0 0.0
    %318 = vmatprep.subr.mxu0 0.0
    %319 = vmatpush2.msra.mxu0 0.0
    %320 = vmatprep.subr.mxu0 0.0
    %321 = vmatpush2.msra.mxu0 0.0
    %322 = vmatprep.subr.mxu0 0.0
    %323 = vmatpush2.msra.mxu0 0.0
    %324 = vmatprep.subr.mxu0 0.0
    %325 = vmatpush2.msra.mxu0 0.0
    %326 = vmatprep.subr.mxu0 0.0
    %327 = vmatpush2.msra.mxu0 0.0
    %328 = vmatprep.subr.mxu0 0.0
    %329 = vmatpush2.msra.mxu0 0.0
    %330 = vmatprep.subr.mxu0 0.0
    %331 = vmatpush2.msra.mxu0 0.0
    %332 = vmatprep.subr.mxu0 0.0
    %333 = vmatpush2.msra.mxu0 0.0
    %334 = vmatprep.subr.mxu0 0.0
    %335 = vmatpush2.msra.mxu0 0.0
    %336 = vmatprep.mubr.bf16.mxu0 0
    %337 = vmatmul.mubr.bf16.gmra.mxu0 %v270
    %v338 = vpop.f32.mrf.mxu0
    %v339 = vadd.f32 %v267, %v338
    %v340 = vpop.f32.mrf.mxu0
    %v341 = vpop.f32.mrf.mxu0
    %v342 = vpop.f32.mrf.mxu0
    %343 = vdwg.mxu0
    %vm344 = vcmask 60416
    %v345 = vsel %vm344, %v339, -inf
    %v346 = vrot.slane %v345, 4
    %v347 = vmax.f32 %v345, %v346
    %v348 = vrot.slane %v347, 2
    %v349 = vmax.f32 %v347, %v348
    %v350 = vrot.slane %v349, 1
    %v351 = vmax.f32 %v349, %v350
    %v352 = vsub.f32 %v339, %v351
    %v353 = vmul.f32 %v352, 1.442695
    %v354 = vpow.pop %v353
    %v355 = vsel %vm344, %v354, 0.0
    %v356 = vrot.slane %v355, 4
    %v357 = vadd.f32 %v355, %v356
    %v358 = vrot.slane %v357, 2
    %v359 = vadd.f32 %v357, %v358
    %v360 = vrot.slane %v359, 1
    %v361 = vadd.f32 %v359, %v360
    %v362 = vrcp.pop %v361
    %v363 = vmul.f32 %v354, %v362
    %364 = vst.msk [vmem:[#allocation2] sm:$0xf] %vm344, %v363
    // Predicated region
    $region38: #{tpu_custom_call.1} parent=1 // pred_check
      _
    $region39: #{tpu_custom_call.1} parent=1 // pred_check_branch
      %366 = sbr.rel (0) target = $region41
    $region40: #{tpu_custom_call.1} parent=1 // pred_region
      %s368 = ssub.s32 64, 64
      %369 = vsyncadd [#allocation3], %s368
      %s371 = sshll.u32 [#allocation2], 4
      %s372 = int_to_ptr.vmem [resolvable:$true] %s371
      %374 = dma.vmem_to_hbm [thread:$0]  %s372, 64, %s9, [#allocation3]
    $region41: #{tpu_custom_call.1} parent=1 // pred_fallthru
      _
    // Predicated region
    $region42: #{tpu_custom_call.1} parent=1 // pred_check
      _
    $region43: #{tpu_custom_call.1} parent=1 // pred_check_branch
      %376 = sbr.rel (0) target = $region45
    $region44: #{tpu_custom_call.1} parent=1 // pred_region
      %377 = dma.done [#allocation3], 64
    $region45: #{tpu_custom_call.1} parent=1 // pred_fallthru
      _
    %378 = vsyncpa [#allocation3], 1

</llo_original>
